<compile_context>
chip_gen: v5e
topology: v5e:2x2
jax: 0.10.0
libtpu: 0.0.40
codegen_flags: <defaults>
</compile_context>

<pallas_src>
import functools
import math

import jax
import jax.numpy as jnp
import numpy as np
from jax.experimental import pallas as pl
from jax.experimental.pallas import tpu as pltpu


# ---------------------------------------------------------------------------
# Fused kernel: out = (x + a[c, :] + wh[f, :]) * (1/sqrt(d_model))
# ---------------------------------------------------------------------------
def _bias_add_scale_kernel(x_ref, a_ref, wh_ref, o_ref, *, scale):
    # x_ref : (1, tc, tfg, L)   current (batch, channel-tile, frame-tile) slab of x
    # a_ref : (tc, L)  f32      per-channel bias (frame + node@edge^T)
    # wh_ref: (tfg, L) f32      per-frame  bias (width + height)
    # Single fused expression: vld -> VPU -> vst, f32 accumulation, cast at store.
    o_ref[0] = ((x_ref[0].astype(jnp.float32)
                 + a_ref[...][:, None, :]
                 + wh_ref[...][None, :, :]) * scale).astype(o_ref.dtype)


# ---------------------------------------------------------------------------
# Tile chooser: (tc, tfg) such that the x block tc*tfg*L*itemsize <= budget.
#   tfg is a multiple of 8 or == FG (second-to-last block dim of x / wh block),
#   tc  is a multiple of 8 or == C  (second-to-last block dim of the a block).
# ---------------------------------------------------------------------------
def _choose_tiles(C, FG, L, itemsize, budget_bytes):
    def blk(tc, tf):
        return tc * tf * L * itemsize

    if blk(C, FG) <= budget_bytes:
        return C, FG
    # Keep full C, shrink the frame-group tile (multiple of 8).
    per_f = max(1, C * L * itemsize)
    tf_cap = (budget_bytes // per_f) // 8 * 8
    if tf_cap >= 8:
        tf = min(tf_cap, FG)
        for cand in range(tf, 7, -8):           # prefer an exact divisor of FG
            if FG % cand == 0:
                return C, cand
        return C, tf
    # Even (C, 8) blocks are too big (large C*L): tile the channel axis too.
    tf = 8 if FG >= 8 else FG
    per_c = max(1, tf * L * itemsize)
    tc_cap = (budget_bytes // per_c) // 8 * 8
    if tc_cap >= 8:
        tc = min(tc_cap, C)
        for cand in range(tc, 7, -8):           # prefer an exact divisor of C
            if C % cand == 0:
                return cand, tf
        return tc, tf
    return (C if C < 8 else 8), tf              # minimal legal block


# ---------------------------------------------------------------------------
# Wrapper: full GraphPositionBias forward
# ---------------------------------------------------------------------------
def graph_position_bias(x, params, d_model, *, tile_budget_bytes=4 << 20):
    frame_e, width_e, height_e, node_e, edge_e = params
    B, C, F, W, H = x.shape
    WH = W * H
    d3 = d_model // 3

    # Shape constraints implied by the PyTorch broadcasting.
    assert B == C or B == 1 or C == 1, "width/height terms require batch ~ channel dim"
    assert frame_e.shape[1] == C and frame_e.shape[2] == W == d3
    assert width_e.shape[1] == F and width_e.shape[2] == H == d3
    assert height_e.shape[1] == F and height_e.shape[2] == W
    assert node_e.shape[1] == C and edge_e.shape[1] == W
    assert node_e.shape[2] == edge_e.shape[2] == d3

    # --- tiny, parameter-sized bias tables (built once in XLA, kept in f32) --
    f32 = jnp.float32
    graph = jnp.matmul(node_e[0].astype(f32), edge_e[0].astype(f32).T)    # (C, W)
    a = frame_e[0].astype(f32) + graph                                    # (C, W)
    a_flat = jnp.repeat(a, H, axis=1)                                     # (C, WH): a[c,w] at w*H+h
    wh_flat = (jnp.tile(width_e[0].astype(f32), (1, W))                   # width[f,h] at w*H+h
               + jnp.repeat(height_e[0].astype(f32), H, axis=1))          # height[f,w] at w*H+h

    # --- lane-density guard: fold frames into the lane dim if WH % 128 != 0 --
    g = 1
    if WH % 128 != 0:
        g_needed = 128 // math.gcd(WH, 128)
        if g_needed <= F and F % g_needed == 0:
            g = g_needed
        # else: accept the lane-sparse tail (still correct, slightly slower stores).
    FG, L = F // g, g * WH
    x4 = x.reshape(B, C, FG, L)                  # contiguous -> free relayout
    wh_fold = wh_flat.reshape(FG, L)
    a_fold = jnp.tile(a_flat, (1, g)) if g > 1 else a_flat

    # --- tiling / grid -------------------------------------------------------
    itemsize = x.dtype.itemsize
    tc, tfg = _choose_tiles(C, FG, L, itemsize, tile_budget_bytes)
    nc, nf = pl.cdiv(C, tc), pl.cdiv(FG, tfg)
    if B * nc * nf < 2:                          # v7x: keep both TensorCores busy
        if FG > 8:
            tfg = max(8, ((FG // 2) // 8) * 8)
            nf = pl.cdiv(FG, tfg)
        elif C > 8:
            tc = max(8, ((C // 2) // 8) * 8)
            nc = pl.cdiv(C, tc)

    scale = float(1.0 / math.sqrt(d_model))
    block_bytes = tc * tfg * L * itemsize
    table_block_bytes = (tc + tfg) * L * 4
    vmem_limit = int(max(min(4 * block_bytes + 2 * table_block_bytes + (2 << 20),
                             100 << 20),
                         16 << 20))
    cost = pl.CostEstimate(
        flops=3 * B * C * F * WH,
        transcendentals=0,
        bytes_accessed=2 * B * C * F * WH * itemsize + (C + FG) * L * 4)

    out4 = pl.pallas_call(
        functools.partial(_bias_add_scale_kernel, scale=scale),
        out_shape=jax.ShapeDtypeStruct((B, C, FG, L), x.dtype),
        grid_spec=pltpu.PrefetchScalarGridSpec(
            num_scalar_prefetch=0,
            grid=(nc, nf, B),                    # batch innermost: table DMAs elided
            in_specs=[
                pl.BlockSpec((1, tc, tfg, L), lambda c, f, b: (b, c, f, 0)),
                pl.BlockSpec((tc, L), lambda c, f, b: (c, 0)),
                pl.BlockSpec((tfg, L), lambda c, f, b: (f, 0)),
            ],
            out_specs=pl.BlockSpec((1, tc, tfg, L), lambda c, f, b: (b, c, f, 0)),
        ),
        compiler_params=pltpu.CompilerParams(
            dimension_semantics=("parallel", "parallel", "parallel"),
            vmem_limit_bytes=vmem_limit),
        cost_estimate=cost,
    )(x4, a_fold, wh_fold)

    return out4.reshape(B, C, F, W, H)


# ---------------------------------------------------------------------------
# Pure-JAX reference mirroring the PyTorch forward exactly
# ---------------------------------------------------------------------------
def reference_forward(x, params, d_model):
    frame_e, width_e, height_e, node_e, edge_e = params
    B = x.shape[0]
    fe = jnp.broadcast_to(frame_e, (B,) + frame_e.shape[1:])
    we = jnp.broadcast_to(width_e, (B,) + width_e.shape[1:])
    he = jnp.broadcast_to(height_e, (B,) + height_e.shape[1:])
    ne = jnp.broadcast_to(node_e, (B,) + node_e.shape[1:])
    ee = jnp.broadcast_to(edge_e, (B,) + edge_e.shape[1:])
    out = (x
           + fe[:, :, None, :, None]        # .unsqueeze(-2).unsqueeze(-1)
           + we[:, :, None, :]              # .unsqueeze(-2)
           + he[:, :, :, None])             # .unsqueeze(-1)
    graph = jnp.matmul(ne, jnp.swapaxes(ee, -1, -2))
    out = out + graph[:, :, None, :, None]  # .unsqueeze(-2).unsqueeze(-1)
    return out / jnp.sqrt(jnp.asarray(d_model, jnp.float32))


def init_params(key, d_model, max_frames, max_width, max_height,
                num_nodes, num_edges):
    d3 = d_model // 3
    ks = jax.random.split(key, 5)
    frame_e = jax.random.normal(ks[0], (1, max_frames, d3), jnp.float32)
    width_e = jax.random.normal(ks[1], (1, max_width, d3), jnp.float32)
    height_e = jax.random.normal(ks[2], (1, max_height, d3), jnp.float32)
    node_e = jax.random.normal(ks[3], (1, num_nodes, d3), jnp.float32)
    edge_e = jax.random.normal(ks[4], (1, num_edges, d3), jnp.float32)
    return frame_e, width_e, height_e, node_e, edge_e


if __name__ == "__main__":
    key = jax.random.PRNGKey(0)
    k_x, k_p = jax.random.split(key)

    # Small shapes consistent with the module's broadcasting rules:
    B = 2
    C = 2            # == max_frames == num_nodes (== B)
    F = 8            # == max_width == max_height
    d_model = 48     # d_model // 3 == 16 == W == H == num_edges
    d3 = d_model // 3
    W = H = d3

    x = jax.random.normal(k_x, (B, C, F, W, H), jnp.float32)
    params = init_params(k_p, d_model, max_frames=C, max_width=F,
                         max_height=F, num_nodes=C, num_edges=W)

    out = graph_position_bias(x, params, d_model)
    out = jax.block_until_ready(out)

    ref = reference_forward(x, params, d_model)
    np.testing.assert_allclose(np.asarray(out), np.asarray(ref),
                               rtol=1e-5, atol=1e-5)
    print("KERNEL_OK")
</pallas_src>

<mosaic_0001>
module attributes {stable_mosaic.version = 11 : i64} {
  func.func @_bias_add_scale_kernel(%arg0: i32, %arg1: i32, %arg2: i32, %arg3: memref<1x2x8x256xf32, #tpu.memory_space<vmem>>, %arg4: memref<2x256xf32, #tpu.memory_space<vmem>>, %arg5: memref<8x256xf32, #tpu.memory_space<vmem>>, %arg6: memref<1x2x8x256xf32, #tpu.memory_space<vmem>>) attributes {dimension_semantics = [#tpu.dimension_semantics<parallel>, #tpu.dimension_semantics<parallel>, #tpu.dimension_semantics<parallel>], iteration_bounds = array<i64: 1, 1, 2>, scalar_prefetch = 0 : i64, scratch_operands = 0 : i64, tpu.core_type = #tpu.core_type<tc>, window_params = [{transform_indices = @transform_0, window_bounds = array<i64: 1, 2, 8, 256>}, {transform_indices = @transform_1, window_bounds = array<i64: 2, 256>}, {transform_indices = @transform_2, window_bounds = array<i64: 8, 256>}, {transform_indices = @transform_3, window_bounds = array<i64: 1, 2, 8, 256>}]} {
    %c0 = arith.constant 0 : index
    %c0_0 = arith.constant 0 : index
    %c0_1 = arith.constant 0 : index
    %c0_2 = arith.constant 0 : index
    %0 = vector.load %arg3[%c0, %c0_0, %c0_1, %c0_2] : memref<1x2x8x256xf32, #tpu.memory_space<vmem>>, vector<1x2x8x256xf32>
    %1 = vector.shape_cast %0 : vector<1x2x8x256xf32> to vector<2x8x256xf32>
    %c0_3 = arith.constant 0 : index
    %c0_4 = arith.constant 0 : index
    %2 = vector.load %arg4[%c0_3, %c0_4] : memref<2x256xf32, #tpu.memory_space<vmem>>, vector<2x256xf32>
    %3 = vector.shape_cast %2 : vector<2x256xf32> to vector<2x1x256xf32>
    %4 = vector.broadcast %3 : vector<2x1x256xf32> to vector<2x8x256xf32>
    %5 = arith.addf %1, %4 : vector<2x8x256xf32>
    %c0_5 = arith.constant 0 : index
    %c0_6 = arith.constant 0 : index
    %6 = vector.load %arg5[%c0_5, %c0_6] : memref<8x256xf32, #tpu.memory_space<vmem>>, vector<8x256xf32>
    %7 = vector.shape_cast %6 : vector<8x256xf32> to vector<1x8x256xf32>
    %8 = vector.broadcast %7 : vector<1x8x256xf32> to vector<2x8x256xf32>
    %9 = arith.addf %5, %8 : vector<2x8x256xf32>
    %cst = arith.constant 0.144337565 : f32
    %10 = vector.broadcast %cst : f32 to vector<2x8x256xf32>
    %11 = arith.mulf %9, %10 : vector<2x8x256xf32>
    %c0_7 = arith.constant 0 : index
    %c0_8 = arith.constant 0 : index
    %c0_9 = arith.constant 0 : index
    %c0_10 = arith.constant 0 : index
    %12 = vector.load %arg6[%c0_7, %c0_8, %c0_9, %c0_10] : memref<1x2x8x256xf32, #tpu.memory_space<vmem>>, vector<1x2x8x256xf32>
    %13 = vector.shape_cast %12 : vector<1x2x8x256xf32> to vector<2x8x256xf32>
    %14 = vector.shape_cast %11 : vector<2x8x256xf32> to vector<1x2x8x256xf32>
    tpu.vector_store %arg6[%c0_7, %c0_8, %c0_9, %c0_10], %14 {strides = array<i32>} : memref<1x2x8x256xf32, #tpu.memory_space<vmem>>, vector<1x2x8x256xf32>,
    return
  }
  func.func @transform_0(%arg0: i32, %arg1: i32, %arg2: i32) -> (i32, i32, i32, i32) {
    %c0_i32 = arith.constant 0 : i32
    %c0_i32_0 = arith.constant 0 : i32
    return %arg2, %arg0, %arg1, %c0_i32 : i32, i32, i32, i32
  }
  func.func @transform_1(%arg0: i32, %arg1: i32, %arg2: i32) -> (i32, i32) {
    %c0_i32 = arith.constant 0 : i32
    %c0_i32_0 = arith.constant 0 : i32
    return %arg0, %c0_i32 : i32, i32
  }
  func.func @transform_2(%arg0: i32, %arg1: i32, %arg2: i32) -> (i32, i32) {
    %c0_i32 = arith.constant 0 : i32
    %c0_i32_0 = arith.constant 0 : i32
    return %arg1, %c0_i32 : i32, i32
  }
  func.func @transform_3(%arg0: i32, %arg1: i32, %arg2: i32) -> (i32, i32, i32, i32) {
    %c0_i32 = arith.constant 0 : i32
    %c0_i32_0 = arith.constant 0 : i32
    return %arg2, %arg0, %arg1, %c0_i32 : i32, i32, i32, i32
  }
}

</mosaic_0001>

<llo_original>
// kernel: tpu_custom_call.1
$region0: #{tpu_custom_call.1}
  #allocation0 [shape = 'u32[]', space=smem, size = 0x4, offset = 0x4, fixed_abs, tag = 'smem constant byte address 0x4 - core index']
  #allocation1 [shape = 'u32[72,128]{1,0:T(1,128)}', space=vmem, size = 0x9000, scoped, tag = 'internal scratch']
  %s0 = inlined_call_operand.hbm [shape: f32[2,2,8,256], index: 0, kind: input, shape index: {}]
  %s1 = inlined_call_operand.hbm [shape: f32[2,256], index: 1, kind: input, shape index: {}]
  %s2 = inlined_call_operand.hbm [shape: f32[8,256], index: 2, kind: input, shape index: {}]
  %s3 = inlined_call_operand.hbm [shape: f32[2,2,8,256], index: 3, kind: output, shape index: {}]
  %s4 = sld [smem:[#allocation0]]
  $region57: #{tpu_custom_call.1} parent=0
    _
  %s6 = ssub.s32 1, %s4
  %s7 = scalar_select 0, %s6, %s4
  $region1: #{tpu_custom_call.1} parent=0
    #allocation2 [shape = 'u8[32768]{0}', space=vmem, size = 0x8000, scoped, tag = 'input window, operand 0']
    #allocation3 [shape = 's32[2]{0}', space=sflag, size = 0x8, scoped, tag = 'scoped memory for tpu_custom_call.1']
    #allocation4 [shape = 's32[2]{0}', space=sflag, size = 0x8, scoped, tag = 'scoped memory for tpu_custom_call.1']
    #allocation5 [shape = 'u8[2048]{0}', space=vmem, size = 0x800, scoped, tag = 'input window, operand 1, single buffered']
    #allocation6 [shape = 's32[1]{0}', space=sflag, size = 0x4, scoped, tag = 'scoped memory for tpu_custom_call.1']
    #allocation7 [shape = 'u8[8192]{0}', space=vmem, size = 0x2000, scoped, tag = 'input window, operand 2, single buffered']
    #allocation8 [shape = 'u8[32768]{0}', space=vmem, size = 0x8000, scoped, tag = 'output window, operand 0']
    %8 = vsyncpa [#allocation3], 0
    %s9 = scalar_lea.sflag [#allocation3], 1
    %10 = vsyncpa %s9, 0
    %11 = vsyncpa [#allocation6], 0
    %12 = vsyncpa [#allocation4], 0
    %s13 = scalar_lea.sflag [#allocation4], 1
    %14 = vsyncpa %s13, 0
    loop: start=0, step=1, limit=4
    $region2: #{tpu_custom_call.1} parent=1 // loop_pre_header
      _
    $region3: #{tpu_custom_call.1} parent=1 // loop_header
      %s16 = sphi 0, %s20
      %p17 = scmp.ge.s32.totalorder %s16, 4
      %s23 = sphi 0, %s42
      %s24 = sphi 0, %s38
      %s25 = sphi 0, %s34
      %s26 = sphi 0, %s23
      %s27 = sphi 0, %s24
      %s28 = sphi 0, %s25
      %s29 = sphi 0, %s26
      %s30 = sphi 0, %s27
      %s31 = sphi 0, %s28
      %s49 = sphi 0, %s51
      %s52 = sphi 0, %s49
      %s53 = sphi 0, %s52
      %s69 = sphi 0, %s53
      %s75 = sphi 0, %s77
      %s78 = sphi 0, %s75
      %s79 = sphi 0, %s78
      %s95 = sphi 0, %s79
      %s101 = sphi 0, %s103
      %s104 = sphi 0, %s101
      %s105 = sphi 0, %s104
      %s121 = sphi 0, %s105
      %s131 = sphi 0, %s133
      %s134 = sphi 0, %s131
      %s135 = sphi 0, %s134
      %s151 = sphi 0, %s135
    $region4: #{tpu_custom_call.1} parent=1 // loop_header_branch
      %19 = sbr.rel (%p17) target = $region8
    $region5: #{tpu_custom_call.1} parent=1 // loop_body
      %s21 = ssub.s32 %s16, 1
      %s22 = ssub.s32 %s16, 2
      %s32 = sadd.s32 1, %s25
      %p33 = scmp.ge.s32.totalorder %s32, 2
      %s34 = scalar_select %p33, 0, %s32
      %s35 = sadd.s32 1, %s24
      %s36 = scalar_select %p33, %s35, %s24
      %p37 = scmp.ge.s32.totalorder %s36, 1
      %s38 = scalar_select %p37, 0, %s36
      %s39 = sadd.s32 1, %s23
      %s40 = scalar_select %p37, %s39, %s23
      %p41 = scmp.ge.s32.totalorder %s40, 1
      %s42 = scalar_select %p41, 0, %s40
      %s43 = ssub.s32 %s25, %s34
      %s44 = ssub.s32 %s23, %s42
      %s45 = sor.u32 %s43, %s44
      %s46 = ssub.s32 %s24, %s38
      %s47 = sor.u32 %s45, %s46
      %p48 = scmp.eq.s32.totalorder %s47, 0
      %s50 = sadd.s32 %s49, 1
      %s51 = scalar_select %p48, %s49, %s50
      %p54 = pneg %p48
      %p55 = scmp.eq.s32.totalorder %s16, 1
      %p56 = por %p54, %p55
      %p57 = scmp.ne.s32.totalorder %s49, %s52
      %p58 = scmp.eq.s32.totalorder %s16, 0
      %p59 = por %p57, %p58
      %p60 = scmp.ne.s32.totalorder %s49, %s52
      %p61 = scmp.eq.s32.totalorder %s21, 1
      %p62 = por %p60, %p61
      %p63 = scmp.ne.s32.totalorder %s52, %s53
      %p64 = scmp.eq.s32.totalorder %s21, 0
      %p65 = por %p63, %p64
      %p66 = scmp.ne.s32.totalorder %s52, %s53
      %p67 = scmp.eq.s32.totalorder %s22, 1
      %p68 = por %p66, %p67
      %p70 = scmp.ne.s32.totalorder %s53, %s69
      %p71 = scmp.eq.s32.totalorder %s22, 0
      %p72 = por %p70, %p71
      %s73 = ssub.s32 %s23, %s42
      %p74 = scmp.eq.s32.totalorder %s73, 0
      %s76 = sadd.s32 %s75, 1
      %s77 = scalar_select %p74, %s75, %s76
      %p80 = pneg %p74
      %p81 = scmp.eq.s32.totalorder %s16, 1
      %p82 = por %p80, %p81
      %p83 = scmp.ne.s32.totalorder %s75, %s78
      %p84 = scmp.eq.s32.totalorder %s16, 0
      %p85 = por %p83, %p84
      %p86 = scmp.ne.s32.totalorder %s75, %s78
      %p87 = scmp.eq.s32.totalorder %s21, 1
      %p88 = por %p86, %p87
      %p89 = scmp.ne.s32.totalorder %s78, %s79
      %p90 = scmp.eq.s32.totalorder %s21, 0
      %p91 = por %p89, %p90
      %p92 = scmp.ne.s32.totalorder %s78, %s79
      %p93 = scmp.eq.s32.totalorder %s22, 1
      %p94 = por %p92, %p93
      %p96 = scmp.ne.s32.totalorder %s79, %s95
      %p97 = scmp.eq.s32.totalorder %s22, 0
      %p98 = por %p96, %p97
      %s99 = ssub.s32 %s24, %s38
      %p100 = scmp.eq.s32.totalorder %s99, 0
      %s102 = sadd.s32 %s101, 1
      %s103 = scalar_select %p100, %s101, %s102
      %p106 = pneg %p100
      %p107 = scmp.eq.s32.totalorder %s16, 1
      %p108 = por %p106, %p107
      %p109 = scmp.ne.s32.totalorder %s101, %s104
      %p110 = scmp.eq.s32.totalorder %s16, 0
      %p111 = por %p109, %p110
      %p112 = scmp.ne.s32.totalorder %s101, %s104
      %p113 = scmp.eq.s32.totalorder %s21, 1
      %p114 = por %p112, %p113
      %p115 = scmp.ne.s32.totalorder %s104, %s105
      %p116 = scmp.eq.s32.totalorder %s21, 0
      %p117 = por %p115, %p116
      %p118 = scmp.ne.s32.totalorder %s104, %s105
      %p119 = scmp.eq.s32.totalorder %s22, 1
      %p120 = por %p118, %p119
      %p122 = scmp.ne.s32.totalorder %s105, %s121
      %p123 = scmp.eq.s32.totalorder %s22, 0
      %p124 = por %p122, %p123
      %s125 = ssub.s32 %s25, %s34
      %s126 = ssub.s32 %s23, %s42
      %s127 = sor.u32 %s125, %s126
      %s128 = ssub.s32 %s24, %s38
      %s129 = sor.u32 %s127, %s128
      %p130 = scmp.eq.s32.totalorder %s129, 0
      %s132 = sadd.s32 %s131, 1
      %s133 = scalar_select %p130, %s131, %s132
      %p136 = pneg %p130
      %p137 = scmp.eq.s32.totalorder %s16, 1
      %p138 = por %p136, %p137
      %p139 = scmp.ne.s32.totalorder %s131, %s134
      %p140 = scmp.eq.s32.totalorder %s16, 0
      %p141 = por %p139, %p140
      %p142 = scmp.ne.s32.totalorder %s131, %s134
      %p143 = scmp.eq.s32.totalorder %s21, 1
      %p144 = por %p142, %p143
      %p145 = scmp.ne.s32.totalorder %s134, %s135
      %p146 = scmp.eq.s32.totalorder %s21, 0
      %p147 = por %p145, %p146
      %p148 = scmp.ne.s32.totalorder %s134, %s135
      %p149 = scmp.eq.s32.totalorder %s22, 1
      %p150 = por %p148, %p149
      %p152 = scmp.ne.s32.totalorder %s135, %s151
      %p153 = scmp.eq.s32.totalorder %s22, 0
      %p154 = por %p152, %p153
      %p155 = scmp.le.s32.totalorder 1, %s16
      %p156 = scmp.lt.s32.totalorder %s16, 3
      %p157 = pnand %p155, %p156
      %p158 = pneg %p157
      // Predicated region
      $region9: #{tpu_custom_call.1} parent=5 // pred_check
        _
      $region10: #{tpu_custom_call.1} parent=5 // pred_check_branch
        %160 = sbr.rel (%p157) target = $region12
      $region11: #{tpu_custom_call.1} parent=5 // pred_region
        %s161 = ssub.s32 %s16, 1
        // Predicated region
        $region13: #{tpu_custom_call.1} parent=11 // pred_check
          %p162 = pneg %p91
        $region14: #{tpu_custom_call.1} parent=11 // pred_check_branch
          %164 = sbr.rel (%p162) target = $region16
        $region15: #{tpu_custom_call.1} parent=11 // pred_region
          %166 = vsyncadd [#allocation6], 0
          %s167 = smul.addr %s26, 2
          %s168 = smul.addr %s167, 2
          %s169 = scalar_lea.hbm %s1, %s168
          %s171 = sshll.u32 %s169, 4
          %s172 = int_to_ptr.hbm [resolvable:$true] %s171
          %s173 = sshll.u32 [#allocation5], 4
          %s174 = int_to_ptr.vmem [resolvable:$true] %s173
          %176 = dma.hbm_to_vmem [thread:$0]  %s172, 64, %s174, [#allocation6]
        $region16: #{tpu_custom_call.1} parent=11 // pred_fallthru
          _
        // Predicated region
        $region17: #{tpu_custom_call.1} parent=11 // pred_check
          %p177 = pneg %p117
        $region18: #{tpu_custom_call.1} parent=11 // pred_check_branch
          %179 = sbr.rel (%p177) target = $region20
        $region19: #{tpu_custom_call.1} parent=11 // pred_region
          %181 = vsyncadd [#allocation6], 0
          %s182 = smul.addr %s27, 2
          %s183 = smul.addr %s182, 8
          %s184 = scalar_lea.hbm %s2, %s183
          %s186 = sshll.u32 %s184, 4
          %s187 = int_to_ptr.hbm [resolvable:$true] %s186
          %s188 = sshll.u32 [#allocation7], 4
          %s189 = int_to_ptr.vmem [resolvable:$true] %s188
          %191 = dma.hbm_to_vmem [thread:$0]  %s187, 256, %s189, [#allocation6]
        $region20: #{tpu_custom_call.1} parent=11 // pred_fallthru
          _
      $region12: #{tpu_custom_call.1} parent=5 // pred_fallthru
        _
      %p192 = scmp.lt.s32.totalorder %s16, 2
      // Predicated region
      $region21: #{tpu_custom_call.1} parent=5 // pred_check
        %p193 = pneg %p192
      $region22: #{tpu_custom_call.1} parent=5 // pred_check_branch
        %195 = sbr.rel (%p193) target = $region24
      $region23: #{tpu_custom_call.1} parent=5 // pred_region
        // Predicated region
        $region25: #{tpu_custom_call.1} parent=23 // pred_check
          %p196 = pneg %p59
        $region26: #{tpu_custom_call.1} parent=23 // pred_check_branch
          %198 = sbr.rel (%p196) target = $region28
        $region27: #{tpu_custom_call.1} parent=23 // pred_region
          %s199 = sand.u32 %s49, 1
          %s200 = scalar_lea.sflag [#allocation3], %s199
          %s201 = sand.u32 %s49, 1
          %s202 = smul.addr %s201, 32
          %s203 = scalar_lea.vmem [#allocation2], %s202
          %s204 = smul.u32 2, %s23
          %206 = vsyncadd %s200, 0
          %s207 = smul.addr %s24, 2
          %s208 = smul.addr %s204, 2
          %s209 = sadd.s32 %s207, %s208
          %s210 = smul.addr %s25, 4
          %s211 = sadd.s32 %s209, %s210
          %s212 = smul.addr %s211, 8
          %s213 = scalar_lea.hbm %s0, %s212
          %s214 = sshll.u32 %s213, 4
          %s215 = int_to_ptr.hbm [resolvable:$true] %s214
          %s216 = sshll.u32 %s203, 4
          %s217 = int_to_ptr.vmem [resolvable:$true] %s216
          %222 = dma.hbm_to_vmem [thread:$0]  %s215, 512, %s217, %s200, 256, 256, 16
        $region28: #{tpu_custom_call.1} parent=23 // pred_fallthru
          _
      $region24: #{tpu_custom_call.1} parent=5 // pred_fallthru
        _
      %p223 = scmp.le.s32.totalorder 1, %s16
      %p224 = scmp.lt.s32.totalorder %s16, 3
      %p225 = pnand %p223, %p224
      %p226 = pneg %p225
      // Predicated region
      $region29: #{tpu_custom_call.1} parent=5 // pred_check
        _
      $region30: #{tpu_custom_call.1} parent=5 // pred_check_branch
        %228 = sbr.rel (%p225) target = $region32
      $region31: #{tpu_custom_call.1} parent=5 // pred_region
        %s229 = ssub.s32 %s16, 1
        %s230 = sand.u32 %s52, 1
        %s231 = scalar_lea.sflag [#allocation3], %s230
        %s232 = sand.u32 %s52, 1
        %s233 = smul.addr %s232, 32
        %s234 = scalar_lea.vmem [#allocation2], %s233
        // Predicated region
        $region33: #{tpu_custom_call.1} parent=31 // pred_check
          %p235 = pneg %p65
        $region34: #{tpu_custom_call.1} parent=31 // pred_check_branch
          %237 = sbr.rel (%p235) target = $region36
        $region35: #{tpu_custom_call.1} parent=31 // pred_region
          %239 = dma.done %s231, 512
        $region36: #{tpu_custom_call.1} parent=31 // pred_fallthru
          _
        // Predicated region
        $region37: #{tpu_custom_call.1} parent=31 // pred_check
          %p240 = pneg %p91
        $region38: #{tpu_custom_call.1} parent=31 // pred_check_branch
          %242 = sbr.rel (%p240) target = $region40
        $region39: #{tpu_custom_call.1} parent=31 // pred_region
          %244 = dma.done [#allocation6], 64
        $region40: #{tpu_custom_call.1} parent=31 // pred_fallthru
          _
        // Predicated region
        $region41: #{tpu_custom_call.1} parent=31 // pred_check
          %p245 = pneg %p117
        $region42: #{tpu_custom_call.1} parent=31 // pred_check_branch
          %247 = sbr.rel (%p245) target = $region44
        $region43: #{tpu_custom_call.1} parent=31 // pred_region
          %249 = dma.done [#allocation6], 256
        $region44: #{tpu_custom_call.1} parent=31 // pred_fallthru
          _
        %s250 = sand.u32 %s52, 1
        %s251 = scalar_lea.sflag [#allocation3], %s250
        %s252 = sand.u32 %s52, 1
        %s253 = smul.addr %s252, 32
        %s254 = scalar_lea.vmem [#allocation2], %s253
        %p255 = pneg %p65
        %p256 = pneg %p62
        %p257 = pneg %p91
        %p258 = pneg %p88
        %p259 = pneg %p117
        %p260 = pneg %p114
        %p261 = pneg %p147
        %p262 = pneg %p144
        %s263 = sand.u32 %s134, 1
        %s264 = scalar_lea.sflag [#allocation4], %s263
        %s265 = sand.u32 %s134, 1
        %s266 = smul.addr %s265, 32
        %s267 = scalar_lea.vmem [#allocation8], %s266
        %s268 = smul.u32 2, %s26
        %s269 = smul.u32 2, %s26
        %v270 = vld [vmem:[%s234] sm:$0xff]
        %v271 = vld [vmem:[%s234 + $0x8] sm:$0xff]
        %v272 = vld [vmem:[%s234 + $0x10] sm:$0xff]
        %v273 = vld [vmem:[%s234 + $0x18] sm:$0xff]
        %v274 = vld [vmem:[#allocation5] sm:$0xf]
        %v276 = vrot.slane %v274, 1
        %v277 = vrot.slane %v274, 2
        %v278 = vrot.slane %v274, 3
        %vm279 = vcmask 1040384
        %v280 = vsel %vm279, %v274, %v276
        %vm281 = vcmask 1042434
        %v282 = vsel %vm281, %v277, %v278
        %vm283 = vcmask 1041408
        %v284 = vsel %vm283, %v280, %v282
        %vm285 = vcmask 1041409
        %v286 = vsel %vm285, %v274, %v276
        %vm287 = vcmask 1043459
        %v288 = vsel %vm287, %v277, %v278
        %vm289 = vcmask 1042433
        %v290 = vsel %vm289, %v286, %v288
        %v291 = vrot.slane %v290, 1
        %v292 = vperm.slane %v284, 0
        %v293 = vperm.slane %v284, 1
        %v294 = vperm.slane %v291, 0
        %v295 = vperm.slane %v291, 1
        %v300 = vadd.f32 %v270, %v292
        %v301 = vadd.f32 %v271, %v293
        %v302 = vadd.f32 %v272, %v294
        %v303 = vadd.f32 %v273, %v295
        %v304 = vld [vmem:[#allocation7] sm:$0xff]
        %v305 = vld [vmem:[#allocation7 + $0x8] sm:$0xff]
        %v306 = vadd.f32 %v300, %v304
        %v307 = vadd.f32 %v301, %v305
        %v308 = vadd.f32 %v302, %v304
        %v309 = vadd.f32 %v303, %v305
        %v310 = vmul.f32 %v306, 0.14433756
        %v311 = vmul.f32 %v307, 0.14433756
        %v312 = vmul.f32 %v308, 0.14433756
        %v313 = vmul.f32 %v309, 0.14433756
        %314 = vst [vmem:[%s267] sm:$0xff] %v310
        %315 = vst [vmem:[%s267 + $0x8] sm:$0xff] %v311
        %316 = vst [vmem:[%s267 + $0x10] sm:$0xff] %v312
        %317 = vst [vmem:[%s267 + $0x18] sm:$0xff] %v313
        %s318 = sand.u32 %s134, 1
        %s319 = scalar_lea.sflag [#allocation4], %s318
        %s320 = sand.u32 %s134, 1
        %s321 = smul.addr %s320, 32
        %s322 = scalar_lea.vmem [#allocation8], %s321
        // Predicated region
        $region45: #{tpu_custom_call.1} parent=31 // pred_check
          %p323 = pneg %p144
        $region46: #{tpu_custom_call.1} parent=31 // pred_check_branch
          %325 = sbr.rel (%p323) target = $region48
        $region47: #{tpu_custom_call.1} parent=31 // pred_region
          %s326 = smul.u32 2, %s26
          %328 = vsyncadd %s319, 0
          %s329 = smul.addr %s27, 2
          %s330 = smul.addr %s326, 2
          %s331 = sadd.s32 %s329, %s330
          %s332 = smul.addr %s28, 4
          %s333 = sadd.s32 %s331, %s332
          %s334 = smul.addr %s333, 8
          %s335 = scalar_lea.hbm %s3, %s334
          %s336 = sshll.u32 %s322, 4
          %s337 = int_to_ptr.vmem [resolvable:$true] %s336
          %s338 = sshll.u32 %s335, 4
          %s339 = int_to_ptr.hbm [resolvable:$true] %s338
          %344 = dma.vmem_to_hbm [thread:$0]  %s337, 512, %s339, %s319, 256, 256, 16
        $region48: #{tpu_custom_call.1} parent=31 // pred_fallthru
          _
      $region32: #{tpu_custom_call.1} parent=5 // pred_fallthru
        _
      %p345 = scmp.le.s32.totalorder 2, %s16
      // Predicated region
      $region49: #{tpu_custom_call.1} parent=5 // pred_check
        %p346 = pneg %p345
      $region50: #{tpu_custom_call.1} parent=5 // pred_check_branch
        %348 = sbr.rel (%p346) target = $region52
      $region51: #{tpu_custom_call.1} parent=5 // pred_region
        %s349 = ssub.s32 %s16, 2
        // Predicated region
        $region53: #{tpu_custom_call.1} parent=51 // pred_check
          %p350 = pneg %p150
        $region54: #{tpu_custom_call.1} parent=51 // pred_check_branch
          %352 = sbr.rel (%p350) target = $region56
        $region55: #{tpu_custom_call.1} parent=51 // pred_region
          %s353 = sand.u32 %s135, 1
          %s354 = scalar_lea.sflag [#allocation4], %s353
          %s355 = sand.u32 %s135, 1
          %s356 = smul.addr %s355, 32
          %s357 = scalar_lea.vmem [#allocation8], %s356
          %359 = dma.done %s354, 512
        $region56: #{tpu_custom_call.1} parent=51 // pred_fallthru
          _
      $region52: #{tpu_custom_call.1} parent=5 // pred_fallthru
        _
    $region6: #{tpu_custom_call.1} parent=1 // loop_footer
      %s20 = sadd.s32 1, %s16
    $region7: #{tpu_custom_call.1} parent=1 // loop_footer_branch
      %15 = sbr.rel target = $region3
    $region8: #{tpu_custom_call.1} parent=1 // loop_exit
      _
    %360 = vsyncpa [#allocation3], 1
    %s361 = scalar_lea.sflag [#allocation3], 1
    %362 = vsyncpa %s361, 1
    %363 = vsyncpa [#allocation6], 1
    %364 = vsyncpa [#allocation4], 1
    %s365 = scalar_lea.sflag [#allocation4], 1
    %366 = vsyncpa %s365, 1

</llo_original>
